<compile_context>
chip_gen: v5e
topology: v5e:2x2
jax: 0.10.0
libtpu: 0.0.40
codegen_flags: <defaults>
</compile_context>

<pallas_src>
import jax
import jax.numpy as jnp
from jax.experimental import pallas as pl
from jax.experimental.pallas import tpu as pltpu

_LANE = 128
_SUBLANE = 8


def _round_up(x, m):
    return ((x + m - 1) // m) * m


def _policy_kernel(x_ref, w1_ref, b1_ref, w2_ref, b2_ref, o_ref):
    # hidden = relu(x @ W1 + b1)   -- MXU matmul (f32 accumulate), VPU max for ReLU
    h = jnp.dot(x_ref[...], w1_ref[...], preferred_element_type=jnp.float32)
    h = jnp.maximum(h + b1_ref[...], 0.0)          # b1 is (1, hidden) -> broadcasts
    # y = hidden @ W2 + b2         -- narrow (tm, out_dim) result, stored directly
    y = jnp.dot(h, w2_ref[...], preferred_element_type=jnp.float32) + b2_ref[...]
    o_ref[...] = y.astype(o_ref.dtype)


def nonlinear_multihead_policy(x, w1, b1, w2, b2, heads, action_dim, *, tm_max=4096):
    """x: [B, input_dim]; w1: [input_dim, hidden]; b1: [1, hidden];
       w2: [hidden, heads*action_dim]; b2: [1, heads*action_dim].
       Returns [B, heads, action_dim]."""
    B, d_in = x.shape
    hidden = w1.shape[1]
    out_dim = heads * action_dim
    assert w1.shape == (d_in, hidden) and b1.shape == (1, hidden)
    assert w2.shape == (hidden, out_dim) and b2.shape == (1, out_dim)

    # Batch tile: big tiles amortize the ~0.35us/step grid overhead, but cap at
    # ceil(B/2) (rounded up to a sublane multiple) so large batches always produce
    # >= 2 grid steps and the "parallel" axis can feed both v7x TensorCores.
    half = pl.cdiv(B, 2)
    tm = max(_SUBLANE, min(tm_max, _round_up(half, _SUBLANE)))
    grid = (pl.cdiv(B, tm),)                       # ragged last block is handled by Pallas

    # Advisory cost estimate: x / out streamed once, weights & biases resident (count once).
    flops = 2 * B * (d_in * hidden + hidden * out_dim)
    bytes_accessed = 4 * (B * d_in + B * out_dim
                          + d_in * hidden + hidden + hidden * out_dim + out_dim)

    y = pl.pallas_call(
        _policy_kernel,
        out_shape=jax.ShapeDtypeStruct((B, out_dim), x.dtype),
        grid=grid,
        in_specs=[
            pl.BlockSpec((tm, d_in), lambda i: (i, 0)),       # x: streamed per batch tile
            pl.BlockSpec((d_in, hidden), lambda i: (0, 0)),   # W1: resident in VMEM
            pl.BlockSpec((1, hidden), lambda i: (0, 0)),      # b1: resident
            pl.BlockSpec((hidden, out_dim), lambda i: (0, 0)),# W2: resident (unpadded)
            pl.BlockSpec((1, out_dim), lambda i: (0, 0)),     # b2: resident (unpadded)
        ],
        out_specs=pl.BlockSpec((tm, out_dim), lambda i: (i, 0)),  # narrow, full-last-dim writes
        compiler_params=pltpu.CompilerParams(
            dimension_semantics=("parallel",),     # batch tiles across both v7x TCs
        ),
        cost_estimate=pl.CostEstimate(
            flops=flops, transcendentals=0, bytes_accessed=bytes_accessed),
    )(x, w1, b1, w2, b2)

    # Only glue left in plain JAX is the view, mirroring x.view(-1, heads, action_dim).
    return y.reshape(B, heads, action_dim)


def _reference(x, w1, b1, w2, b2, heads, action_dim):
    h = jnp.maximum(x @ w1 + b1, 0.0)
    y = h @ w2 + b2
    return y.reshape(-1, heads, action_dim)


if __name__ == "__main__":
    # Module hyper-parameters (small, consistent with the forward pass).
    input_dim = 16
    hidden_dim = 32
    action_dim = 4
    heads = 3
    batch = 8

    key = jax.random.PRNGKey(0)
    k_x, k_w1, k_b1, k_w2, k_b2, k_x2 = jax.random.split(key, 6)

    x = jax.random.normal(k_x, (batch, input_dim), dtype=jnp.float32)

    # Deterministic parameter init (nn.Linear-like uniform ranges), weights stored
    # as [in_features, out_features] (i.e. already transposed vs. PyTorch).
    lim1 = 1.0 / (input_dim ** 0.5)
    w1 = jax.random.uniform(k_w1, (input_dim, hidden_dim), jnp.float32, -lim1, lim1)
    b1 = jax.random.uniform(k_b1, (1, hidden_dim), jnp.float32, -lim1, lim1)

    lim2 = 1.0 / (hidden_dim ** 0.5)
    w2 = jax.random.uniform(k_w2, (hidden_dim, heads * action_dim), jnp.float32, -lim2, lim2)
    b2 = jax.random.uniform(k_b2, (1, heads * action_dim), jnp.float32, -lim2, lim2)

    # Small batch (single tile, exact fit).
    out = nonlinear_multihead_policy(x, w1, b1, w2, b2, heads, action_dim)
    out = jax.block_until_ready(out)
    ref = _reference(x, w1, b1, w2, b2, heads, action_dim)
    assert out.shape == (batch, heads, action_dim)
    assert jnp.allclose(out, ref, atol=1e-5, rtol=1e-5)

    # Larger batch: exercises multi-step grid, resident weights, ragged last block.
    batch2 = 2050
    x2 = jax.random.normal(k_x2, (batch2, input_dim), dtype=jnp.float32)
    out2 = nonlinear_multihead_policy(x2, w1, b1, w2, b2, heads, action_dim)
    out2 = jax.block_until_ready(out2)
    ref2 = _reference(x2, w1, b1, w2, b2, heads, action_dim)
    assert out2.shape == (batch2, heads, action_dim)
    assert jnp.allclose(out2, ref2, atol=1e-5, rtol=1e-5)

    print("KERNEL_OK")
</pallas_src>

<mosaic_0001>
module attributes {stable_mosaic.version = 11 : i64} {
  func.func @_policy_kernel(%arg0: i32, %arg1: memref<8x16xf32, #tpu.memory_space<vmem>>, %arg2: memref<16x32xf32, #tpu.memory_space<vmem>>, %arg3: memref<1x32xf32, #tpu.memory_space<vmem>>, %arg4: memref<32x12xf32, #tpu.memory_space<vmem>>, %arg5: memref<1x12xf32, #tpu.memory_space<vmem>>, %arg6: memref<8x12xf32, #tpu.memory_space<vmem>>) attributes {dimension_semantics = [#tpu.dimension_semantics<parallel>], iteration_bounds = array<i64: 1>, scalar_prefetch = 0 : i64, scratch_operands = 0 : i64, tpu.core_type = #tpu.core_type<tc>, window_params = [{transform_indices = @transform_0, window_bounds = array<i64: 8, 16>}, {pipeline_mode = #tpu.pipeline_mode<synchronous>, transform_indices = @transform_1, window_bounds = array<i64: 16, 32>}, {pipeline_mode = #tpu.pipeline_mode<synchronous>, transform_indices = @transform_2, window_bounds = array<i64: 1, 32>}, {pipeline_mode = #tpu.pipeline_mode<synchronous>, transform_indices = @transform_3, window_bounds = array<i64: 32, 12>}, {pipeline_mode = #tpu.pipeline_mode<synchronous>, transform_indices = @transform_4, window_bounds = array<i64: 1, 12>}, {transform_indices = @transform_5, window_bounds = array<i64: 8, 12>}]} {
    %c0 = arith.constant 0 : index
    %c0_0 = arith.constant 0 : index
    %0 = vector.load %arg1[%c0, %c0_0] : memref<8x16xf32, #tpu.memory_space<vmem>>, vector<8x16xf32>
    %c0_1 = arith.constant 0 : index
    %c0_2 = arith.constant 0 : index
    %1 = vector.load %arg2[%c0_1, %c0_2] : memref<16x32xf32, #tpu.memory_space<vmem>>, vector<16x32xf32>
    %cst = arith.constant dense<0.000000e+00> : vector<8x32xf32>
    %2 = tpu.matmul %0, %1, %cst {dimension_numbers = #tpu.dot_dimension_numbers<[1], [0], [0], [1], [0, 0, 1, 1], [], []>} : vector<8x16xf32>, vector<16x32xf32>, vector<8x32xf32> -> vector<8x32xf32>
    %c0_3 = arith.constant 0 : index
    %c0_4 = arith.constant 0 : index
    %3 = vector.load %arg3[%c0_3, %c0_4] : memref<1x32xf32, #tpu.memory_space<vmem>>, vector<1x32xf32>
    %4 = vector.broadcast %3 : vector<1x32xf32> to vector<8x32xf32>
    %5 = arith.addf %2, %4 : vector<8x32xf32>
    %cst_5 = arith.constant 0.000000e+00 : f32
    %6 = vector.broadcast %cst_5 : f32 to vector<8x32xf32>
    %7 = arith.maximumf %5, %6 : vector<8x32xf32>
    %c0_6 = arith.constant 0 : index
    %c0_7 = arith.constant 0 : index
    %8 = vector.load %arg4[%c0_6, %c0_7] : memref<32x12xf32, #tpu.memory_space<vmem>>, vector<32x12xf32>
    %cst_8 = arith.constant dense<0.000000e+00> : vector<8x12xf32>
    %9 = tpu.matmul %7, %8, %cst_8 {dimension_numbers = #tpu.dot_dimension_numbers<[1], [0], [0], [1], [0, 0, 1, 1], [], []>} : vector<8x32xf32>, vector<32x12xf32>, vector<8x12xf32> -> vector<8x12xf32>
    %c0_9 = arith.constant 0 : index
    %c0_10 = arith.constant 0 : index
    %10 = vector.load %arg5[%c0_9, %c0_10] : memref<1x12xf32, #tpu.memory_space<vmem>>, vector<1x12xf32>
    %11 = vector.broadcast %10 : vector<1x12xf32> to vector<8x12xf32>
    %12 = arith.addf %9, %11 : vector<8x12xf32>
    %c0_11 = arith.constant 0 : index
    %c0_12 = arith.constant 0 : index
    %13 = vector.load %arg6[%c0_11, %c0_12] : memref<8x12xf32, #tpu.memory_space<vmem>>, vector<8x12xf32>
    tpu.vector_store %arg6[%c0_11, %c0_12], %12 {strides = array<i32>} : memref<8x12xf32, #tpu.memory_space<vmem>>, vector<8x12xf32>,
    return
  }
  func.func @transform_0(%arg0: i32) -> (i32, i32) {
    %c0_i32 = arith.constant 0 : i32
    %c0_i32_0 = arith.constant 0 : i32
    return %arg0, %c0_i32 : i32, i32
  }
  func.func @transform_1(%arg0: i32) -> (i32, i32) {
    %c0_i32 = arith.constant 0 : i32
    %c0_i32_0 = arith.constant 0 : i32
    %c0_i32_1 = arith.constant 0 : i32
    return %c0_i32, %c0_i32_0 : i32, i32
  }
  func.func @transform_2(%arg0: i32) -> (i32, i32) {
    %c0_i32 = arith.constant 0 : i32
    %c0_i32_0 = arith.constant 0 : i32
    %c0_i32_1 = arith.constant 0 : i32
    return %c0_i32, %c0_i32_0 : i32, i32
  }
  func.func @transform_3(%arg0: i32) -> (i32, i32) {
    %c0_i32 = arith.constant 0 : i32
    %c0_i32_0 = arith.constant 0 : i32
    %c0_i32_1 = arith.constant 0 : i32
    return %c0_i32, %c0_i32_0 : i32, i32
  }
  func.func @transform_4(%arg0: i32) -> (i32, i32) {
    %c0_i32 = arith.constant 0 : i32
    %c0_i32_0 = arith.constant 0 : i32
    %c0_i32_1 = arith.constant 0 : i32
    return %c0_i32, %c0_i32_0 : i32, i32
  }
  func.func @transform_5(%arg0: i32) -> (i32, i32) {
    %c0_i32 = arith.constant 0 : i32
    %c0_i32_0 = arith.constant 0 : i32
    return %arg0, %c0_i32 : i32, i32
  }
}

</mosaic_0001>

<llo_original>
// kernel: tpu_custom_call.1
$region0: #{tpu_custom_call.1}
  #allocation0 [shape = 'u32[]', space=smem, size = 0x4, offset = 0x4, fixed_abs, tag = 'smem constant byte address 0x4 - core index']
  #allocation1 [shape = 'u32[72,128]{1,0:T(1,128)}', space=vmem, size = 0x9000, scoped, tag = 'internal scratch']
  %s0 = inlined_call_operand.vmem [shape: f32[8,16], index: 0, kind: input, shape index: {}]
  %s1 = inlined_call_operand.vmem [shape: f32[16,32], index: 1, kind: input, shape index: {}]
  %s2 = inlined_call_operand.vmem [shape: f32[1,32], index: 2, kind: input, shape index: {}]
  %s3 = inlined_call_operand.vmem [shape: f32[32,12], index: 3, kind: input, shape index: {}]
  %s4 = inlined_call_operand.vmem [shape: f32[1,12], index: 4, kind: input, shape index: {}]
  %s5 = inlined_call_operand.hbm [shape: f32[8,12], index: 5, kind: output, shape index: {}]
  %s6 = sld [smem:[#allocation0]]
  $region30: #{tpu_custom_call.1} parent=0
    _
  %s8 = ssub.s32 1, %s6
  %s9 = scalar_select 0, %s8, %s6
  $region1: #{tpu_custom_call.1} parent=0
    #allocation2 [shape = 'u8[4096]{0}', space=vmem, size = 0x1000, scoped, tag = 'output window, operand 0, single buffered']
    #allocation3 [shape = 's32[1]{0}', space=sflag, size = 0x4, scoped, tag = 'scoped memory for tpu_custom_call.1']
    %10 = vsyncpa [#allocation3], 0
    // Predicated region
    $region2: #{tpu_custom_call.1} parent=1 // pred_check
      _
    $region3: #{tpu_custom_call.1} parent=1 // pred_check_branch
      %12 = sbr.rel (0) target = $region5
    $region4: #{tpu_custom_call.1} parent=1 // pred_region
      _
    $region5: #{tpu_custom_call.1} parent=1 // pred_fallthru
      _
    // Predicated region
    $region6: #{tpu_custom_call.1} parent=1 // pred_check
      _
    $region7: #{tpu_custom_call.1} parent=1 // pred_check_branch
      %14 = sbr.rel (0) target = $region9
    $region8: #{tpu_custom_call.1} parent=1 // pred_region
      _
    $region9: #{tpu_custom_call.1} parent=1 // pred_fallthru
      _
    // Predicated region
    $region10: #{tpu_custom_call.1} parent=1 // pred_check
      _
    $region11: #{tpu_custom_call.1} parent=1 // pred_check_branch
      %16 = sbr.rel (0) target = $region13
    $region12: #{tpu_custom_call.1} parent=1 // pred_region
      _
    $region13: #{tpu_custom_call.1} parent=1 // pred_fallthru
      _
    // Predicated region
    $region14: #{tpu_custom_call.1} parent=1 // pred_check
      _
    $region15: #{tpu_custom_call.1} parent=1 // pred_check_branch
      %18 = sbr.rel (0) target = $region17
    $region16: #{tpu_custom_call.1} parent=1 // pred_region
      _
    $region17: #{tpu_custom_call.1} parent=1 // pred_fallthru
      _
    // Predicated region
    $region18: #{tpu_custom_call.1} parent=1 // pred_check
      _
    $region19: #{tpu_custom_call.1} parent=1 // pred_check_branch
      %20 = sbr.rel (0) target = $region21
    $region20: #{tpu_custom_call.1} parent=1 // pred_region
      _
    $region21: #{tpu_custom_call.1} parent=1 // pred_fallthru
      _
    %v21 = vld [vmem:[%s0] sm:$0xff]
    %v22 = vld [vmem:[%s1] sm:$0xff]
    %v23 = vld [vmem:[%s1 + $0x8] sm:$0xff]
    %v24 = vld [vmem:[%s2] sm:$0x1]
    %v26 = vperm.slane %v24, 0
    %vm28 = vcmask 130048
    %v30 = vsel %vm28, %v21, 0
    %32 = vmatpush.msra.mxu0 0.0
    %33 = vmatpush.msra.mxu0 0.0
    %34 = vmatpush.msra.mxu0 0.0
    %35 = vmatpush.msra.mxu0 0.0
    %36 = vmatpush.msra.mxu0 0.0
    %37 = vmatpush.msra.mxu0 0.0
    %38 = vmatpush.msra.mxu0 0.0
    %39 = vmatpush.msra.mxu0 0.0
    %40 = vmatpush.msra.mxu0 0.0
    %41 = vmatpush.msra.mxu0 0.0
    %42 = vmatpush.msra.mxu0 0.0
    %43 = vmatpush.msra.mxu0 0.0
    %44 = vmatpush.msra.mxu0 0.0
    %45 = vmatpush.msra.mxu0 0.0
    %46 = vmatpush.msra.mxu0 %v23
    %47 = vmatpush.msra.mxu0 %v22
    %48 = vmatmul.f32.gmra.mxu0 %v30
    %v49 = vpop.f32.mrf.mxu0
    %v50 = vadd.f32 %v26, %v49
    %51 = vdwg.mxu0
    %v52 = vmax.f32 %v50, 0.0
    %v53 = vld [vmem:[%s3] sm:$0xff]
    %v54 = vld [vmem:[%s3 + $0x8] sm:$0xff]
    %v55 = vld [vmem:[%s3 + $0x10] sm:$0xff]
    %v56 = vld [vmem:[%s3 + $0x18] sm:$0xff]
    %v57 = vld [vmem:[%s4] sm:$0x1]
    %v59 = vperm.slane %v57, 0
    %vm61 = vcmask 261120
    %v63 = vsel %vm61, %v52, 0
    %65 = vmatpush.msra.mxu0 0.0
    %66 = vmatpush.msra.mxu0 0.0
    %67 = vmatpush.msra.mxu0 0.0
    %68 = vmatpush.msra.mxu0 0.0
    %69 = vmatpush.msra.mxu0 0.0
    %70 = vmatpush.msra.mxu0 0.0
    %71 = vmatpush.msra.mxu0 0.0
    %72 = vmatpush.msra.mxu0 0.0
    %73 = vmatpush.msra.mxu0 0.0
    %74 = vmatpush.msra.mxu0 0.0
    %75 = vmatpush.msra.mxu0 0.0
    %76 = vmatpush.msra.mxu0 0.0
    %77 = vmatpush.msra.mxu0 %v56
    %78 = vmatpush.msra.mxu0 %v55
    %79 = vmatpush.msra.mxu0 %v54
    %80 = vmatpush.msra.mxu0 %v53
    %81 = vmatmul.f32.gmra.mxu0 %v63
    %v82 = vpop.f32.mrf.mxu0
    %v83 = vadd.f32 %v59, %v82
    %84 = vdwg.mxu0
    %vm85 = vcmask 97280
    %86 = vst.msk [vmem:[#allocation2] sm:$0xff] %vm85, %v83
    // Predicated region
    $region22: #{tpu_custom_call.1} parent=1 // pred_check
      _
    $region23: #{tpu_custom_call.1} parent=1 // pred_check_branch
      %88 = sbr.rel (0) target = $region25
    $region24: #{tpu_custom_call.1} parent=1 // pred_region
      %90 = vsyncadd [#allocation3], 0
      %s92 = sshll.u32 [#allocation2], 4
      %s93 = int_to_ptr.vmem [resolvable:$true] %s92
      %s94 = sshll.u32 %s5, 4
      %s95 = int_to_ptr.hbm [resolvable:$true] %s94
      %97 = dma.vmem_to_hbm [thread:$0]  %s93, 128, %s95, [#allocation3]
    $region25: #{tpu_custom_call.1} parent=1 // pred_fallthru
      _
    // Predicated region
    $region26: #{tpu_custom_call.1} parent=1 // pred_check
      _
    $region27: #{tpu_custom_call.1} parent=1 // pred_check_branch
      %99 = sbr.rel (0) target = $region29
    $region28: #{tpu_custom_call.1} parent=1 // pred_region
      %101 = dma.done [#allocation3], 128
    $region29: #{tpu_custom_call.1} parent=1 // pred_fallthru
      _
    %102 = vsyncpa [#allocation3], 1

</llo_original>
